<compile_context>
chip_gen: v6e
topology: v6e:2x2x1
jax: 0.10.0
libtpu: 0.0.40
codegen_flags: <defaults>
</compile_context>

<pallas_src>
import jax
import jax.numpy as jnp
from jax.experimental import pallas as pl
from jax.experimental.pallas import tpu as pltpu


def _make_gather_kernel(g_rows: int):
    """Kernel: gather g_rows embedding rows (one feature tile) via DMA."""

    def kernel(idx_ref, emb_hbm, out_ref, sems):
        # idx_ref : (N_pad,) int32 in SMEM (scalar prefetch)
        # emb_hbm : (V, D_pad) raw HBM ref (memory_space=pl.ANY)
        # out_ref : (g_rows, TD) VMEM output block for this grid step
        # sems    : (g_rows,) DMA semaphores
        i = pl.program_id(0)          # row-group index
        j = pl.program_id(1)          # feature-tile index
        td = out_ref.shape[-1]
        col0 = j * td
        if td % 128 == 0:
            col0 = pl.multiple_of(col0, 128)

        def dma(g):
            row = idx_ref[i * g_rows + g]
            return pltpu.make_async_copy(
                emb_hbm.at[row, pl.ds(col0, td)],   # (TD,) strip in HBM
                out_ref.at[g],                      # (TD,) row of the out block
                sems.at[g],
            )

        # Issue all gathers, then wait; all g_rows DMAs are in flight at once.
        for g in range(g_rows):
            dma(g).start()
        for g in range(g_rows):
            dma(g).wait()

    return kernel


def _choose_feature_tile(d: int, cap_elems: int):
    """Return (td, d_pad): feature tile size and (possibly padded) feature dim."""
    cap_elems = max(int(cap_elems), 128)
    if d <= cap_elems:
        return d, d                               # whole row per step
    cap_td = (cap_elems // 128) * 128
    # Largest 128-multiple divisor of d that is <= cap_td.
    td = 0
    for cand in range(cap_td, 127, -128):
        if d % cand == 0:
            td = cand
            break
    if td >= max(cap_td // 4, 128):
        return td, d
    # Degenerate factorization (or d not a multiple of 128): pad D so a
    # near-cap tile divides it; extra columns are sliced off afterwards.
    d_pad = -(-d // cap_td) * cap_td
    return cap_td, d_pad


def prefix_encoder(prefix: jax.Array, embedding: jax.Array,
                   *, feature_tile_cap: int = 64 * 1024) -> jax.Array:
    """prefix: (B, L) int; embedding: (V, D) float -> (B, L, D) float."""
    b, l = prefix.shape
    v, d = embedding.shape
    n = b * l

    itemsize = jnp.dtype(embedding.dtype).itemsize
    # Rows gathered per grid step: sublane-dense output block for this dtype.
    g_rows = max(8, 32 // max(itemsize, 1))       # f32->8, bf16->16, int8->32

    td, d_pad = _choose_feature_tile(d, feature_tile_cap)
    if d_pad != d:
        embedding = jnp.pad(embedding, ((0, 0), (0, d_pad - d)))
    n_td = d_pad // td

    # Flatten, clamp (OOB index would otherwise become a fatal OOB HBM DMA),
    # and pad the row count up to a multiple of g_rows with a valid index.
    idx = jnp.clip(prefix.reshape(n).astype(jnp.int32), 0, v - 1)
    n_pad = -(-n // g_rows) * g_rows
    if n_pad != n:
        idx = jnp.pad(idx, (0, n_pad - n))

    out = pl.pallas_call(
        _make_gather_kernel(g_rows),
        out_shape=jax.ShapeDtypeStruct((n_pad, d_pad), embedding.dtype),
        grid_spec=pltpu.PrefetchScalarGridSpec(
            num_scalar_prefetch=1,
            grid=(n_pad // g_rows, n_td),
            in_specs=[
                # Table never resident in VMEM: raw HBM ref, gathered manually.
                pl.BlockSpec(memory_space=pl.ANY),
            ],
            out_specs=pl.BlockSpec((g_rows, td), lambda i, j, ids: (i, j)),
            scratch_shapes=[pltpu.SemaphoreType.DMA((g_rows,))],
        ),
        compiler_params=pltpu.CompilerParams(
            dimension_semantics=("parallel", "arbitrary"),
        ),
    )(idx, embedding)

    out = out[:n, :d]
    return out.reshape(b, l, d)


if __name__ == "__main__":
    # Small config consistent with the module:
    #   pre_seq_len=8, num_hidden_layers=2, hidden_size=32 -> D = 2*2*32 = 128
    batch = 2
    prefix_len = 8          # tokens per example (values index into pre_seq_len)
    pre_seq_len = 8         # embedding "vocabulary" (number of prefix slots)
    num_hidden_layers = 2
    hidden_size = 32
    d = 2 * num_hidden_layers * hidden_size      # 128

    key = jax.random.PRNGKey(0)
    k_idx, k_emb = jax.random.split(key)

    prefix = jax.random.randint(
        k_idx, (batch, prefix_len), minval=0, maxval=pre_seq_len, dtype=jnp.int32
    )
    embedding = jax.random.normal(k_emb, (pre_seq_len, d), dtype=jnp.float32)

    out = prefix_encoder(prefix, embedding)
    out = jax.block_until_ready(out)

    # Reference: plain embedding lookup.
    ref = jnp.take(embedding, prefix, axis=0)
    assert out.shape == (batch, prefix_len, d), out.shape
    assert jnp.allclose(out, ref), "mismatch vs. reference embedding lookup"

    print("KERNEL_OK")
</pallas_src>

<mosaic_0001>
module attributes {stable_mosaic.version = 11 : i64} {
  func.func @kernel(%arg0: i32, %arg1: i32, %arg2: memref<16xi32, #tpu.memory_space<smem>>, %arg3: memref<8x128xf32, #tpu.memory_space<any>>, %arg4: memref<8x128xf32, #tpu.memory_space<vmem>>, %arg5: memref<8x!tpu.dma_semaphore, #tpu.memory_space<semaphore_mem>>) attributes {dimension_semantics = [#tpu.dimension_semantics<parallel>, #tpu.dimension_semantics<arbitrary>], iteration_bounds = array<i64: 2, 1>, scalar_prefetch = 1 : i64, scratch_operands = 1 : i64, tpu.core_type = #tpu.core_type<tc>, window_params = [{}, {transform_indices = @transform_1, window_bounds = array<i64: 8, 128>}]} {
    %c128_i32 = arith.constant 128 : i32
    %0 = arith.muli %arg1, %c128_i32 : i32
    %1 = tpu.assume_multiple %0, 128 : i32
    %c8_i32 = arith.constant 8 : i32
    %2 = arith.muli %arg0, %c8_i32 : i32
    %c0_i32 = arith.constant 0 : i32
    %3 = arith.addi %2, %c0_i32 : i32
    %4 = arith.index_cast %3 : i32 to index
    %5 = memref.load %arg2[%4] : memref<16xi32, #tpu.memory_space<smem>>
    %c0_i32_0 = arith.constant 0 : i32
    %c0_i32_1 = arith.constant 0 : i32
    %6 = tpu.memref_slice %arg3[%5, %1] : memref<8x128xf32, #tpu.memory_space<any>> -> memref<1x128xf32, #tpu.memory_space<any>>
    %7 = tpu.memref_squeeze %6 : memref<1x128xf32, #tpu.memory_space<any>> -> memref<128xf32, #tpu.memory_space<any>>
    %c0_i32_2 = arith.constant 0 : i32
    %8 = tpu.memref_slice %arg4[%c0_i32_0, %c0_i32_2] : memref<8x128xf32, #tpu.memory_space<vmem>> -> memref<1x128xf32, #tpu.memory_space<vmem>>
    %9 = tpu.memref_squeeze %8 : memref<1x128xf32, #tpu.memory_space<vmem>> -> memref<128xf32, #tpu.memory_space<vmem>>
    %10 = tpu.memref_slice %arg5[%c0_i32_1] : memref<8x!tpu.dma_semaphore, #tpu.memory_space<semaphore_mem>> -> memref<1x!tpu.dma_semaphore, #tpu.memory_space<semaphore_mem>>
    %11 = tpu.memref_squeeze %10 : memref<1x!tpu.dma_semaphore, #tpu.memory_space<semaphore_mem>> -> memref<!tpu.dma_semaphore, #tpu.memory_space<semaphore_mem>>
    tpu.enqueue_dma source(%7 : memref<128xf32, #tpu.memory_space<any>>) target(%9 : memref<128xf32, #tpu.memory_space<vmem>>) target_semaphore(%11 : memref<!tpu.dma_semaphore, #tpu.memory_space<semaphore_mem>>)
    %c8_i32_3 = arith.constant 8 : i32
    %12 = arith.muli %arg0, %c8_i32_3 : i32
    %c1_i32 = arith.constant 1 : i32
    %13 = arith.addi %12, %c1_i32 : i32
    %14 = arith.index_cast %13 : i32 to index
    %15 = memref.load %arg2[%14] : memref<16xi32, #tpu.memory_space<smem>>
    %c1_i32_4 = arith.constant 1 : i32
    %c1_i32_5 = arith.constant 1 : i32
    %16 = tpu.memref_slice %arg3[%15, %1] : memref<8x128xf32, #tpu.memory_space<any>> -> memref<1x128xf32, #tpu.memory_space<any>>
    %17 = tpu.memref_squeeze %16 : memref<1x128xf32, #tpu.memory_space<any>> -> memref<128xf32, #tpu.memory_space<any>>
    %c0_i32_6 = arith.constant 0 : i32
    %18 = tpu.memref_slice %arg4[%c1_i32_4, %c0_i32_6] : memref<8x128xf32, #tpu.memory_space<vmem>> -> memref<1x128xf32, #tpu.memory_space<vmem>>
    %19 = tpu.memref_squeeze %18 : memref<1x128xf32, #tpu.memory_space<vmem>> -> memref<128xf32, #tpu.memory_space<vmem>>
    %20 = tpu.memref_slice %arg5[%c1_i32_5] : memref<8x!tpu.dma_semaphore, #tpu.memory_space<semaphore_mem>> -> memref<1x!tpu.dma_semaphore, #tpu.memory_space<semaphore_mem>>
    %21 = tpu.memref_squeeze %20 : memref<1x!tpu.dma_semaphore, #tpu.memory_space<semaphore_mem>> -> memref<!tpu.dma_semaphore, #tpu.memory_space<semaphore_mem>>
    tpu.enqueue_dma source(%17 : memref<128xf32, #tpu.memory_space<any>>) target(%19 : memref<128xf32, #tpu.memory_space<vmem>>) target_semaphore(%21 : memref<!tpu.dma_semaphore, #tpu.memory_space<semaphore_mem>>)
    %c8_i32_7 = arith.constant 8 : i32
    %22 = arith.muli %arg0, %c8_i32_7 : i32
    %c2_i32 = arith.constant 2 : i32
    %23 = arith.addi %22, %c2_i32 : i32
    %24 = arith.index_cast %23 : i32 to index
    %25 = memref.load %arg2[%24] : memref<16xi32, #tpu.memory_space<smem>>
    %c2_i32_8 = arith.constant 2 : i32
    %c2_i32_9 = arith.constant 2 : i32
    %26 = tpu.memref_slice %arg3[%25, %1] : memref<8x128xf32, #tpu.memory_space<any>> -> memref<1x128xf32, #tpu.memory_space<any>>
    %27 = tpu.memref_squeeze %26 : memref<1x128xf32, #tpu.memory_space<any>> -> memref<128xf32, #tpu.memory_space<any>>
    %c0_i32_10 = arith.constant 0 : i32
    %28 = tpu.memref_slice %arg4[%c2_i32_8, %c0_i32_10] : memref<8x128xf32, #tpu.memory_space<vmem>> -> memref<1x128xf32, #tpu.memory_space<vmem>>
    %29 = tpu.memref_squeeze %28 : memref<1x128xf32, #tpu.memory_space<vmem>> -> memref<128xf32, #tpu.memory_space<vmem>>
    %30 = tpu.memref_slice %arg5[%c2_i32_9] : memref<8x!tpu.dma_semaphore, #tpu.memory_space<semaphore_mem>> -> memref<1x!tpu.dma_semaphore, #tpu.memory_space<semaphore_mem>>
    %31 = tpu.memref_squeeze %30 : memref<1x!tpu.dma_semaphore, #tpu.memory_space<semaphore_mem>> -> memref<!tpu.dma_semaphore, #tpu.memory_space<semaphore_mem>>
    tpu.enqueue_dma source(%27 : memref<128xf32, #tpu.memory_space<any>>) target(%29 : memref<128xf32, #tpu.memory_space<vmem>>) target_semaphore(%31 : memref<!tpu.dma_semaphore, #tpu.memory_space<semaphore_mem>>)
    %c8_i32_11 = arith.constant 8 : i32
    %32 = arith.muli %arg0, %c8_i32_11 : i32
    %c3_i32 = arith.constant 3 : i32
    %33 = arith.addi %32, %c3_i32 : i32
    %34 = arith.index_cast %33 : i32 to index
    %35 = memref.load %arg2[%34] : memref<16xi32, #tpu.memory_space<smem>>
    %c3_i32_12 = arith.constant 3 : i32
    %c3_i32_13 = arith.constant 3 : i32
    %36 = tpu.memref_slice %arg3[%35, %1] : memref<8x128xf32, #tpu.memory_space<any>> -> memref<1x128xf32, #tpu.memory_space<any>>
    %37 = tpu.memref_squeeze %36 : memref<1x128xf32, #tpu.memory_space<any>> -> memref<128xf32, #tpu.memory_space<any>>
    %c0_i32_14 = arith.constant 0 : i32
    %38 = tpu.memref_slice %arg4[%c3_i32_12, %c0_i32_14] : memref<8x128xf32, #tpu.memory_space<vmem>> -> memref<1x128xf32, #tpu.memory_space<vmem>>
    %39 = tpu.memref_squeeze %38 : memref<1x128xf32, #tpu.memory_space<vmem>> -> memref<128xf32, #tpu.memory_space<vmem>>
    %40 = tpu.memref_slice %arg5[%c3_i32_13] : memref<8x!tpu.dma_semaphore, #tpu.memory_space<semaphore_mem>> -> memref<1x!tpu.dma_semaphore, #tpu.memory_space<semaphore_mem>>
    %41 = tpu.memref_squeeze %40 : memref<1x!tpu.dma_semaphore, #tpu.memory_space<semaphore_mem>> -> memref<!tpu.dma_semaphore, #tpu.memory_space<semaphore_mem>>
    tpu.enqueue_dma source(%37 : memref<128xf32, #tpu.memory_space<any>>) target(%39 : memref<128xf32, #tpu.memory_space<vmem>>) target_semaphore(%41 : memref<!tpu.dma_semaphore, #tpu.memory_space<semaphore_mem>>)
    %c8_i32_15 = arith.constant 8 : i32
    %42 = arith.muli %arg0, %c8_i32_15 : i32
    %c4_i32 = arith.constant 4 : i32
    %43 = arith.addi %42, %c4_i32 : i32
    %44 = arith.index_cast %43 : i32 to index
    %45 = memref.load %arg2[%44] : memref<16xi32, #tpu.memory_space<smem>>
    %c4_i32_16 = arith.constant 4 : i32
    %c4_i32_17 = arith.constant 4 : i32
    %46 = tpu.memref_slice %arg3[%45, %1] : memref<8x128xf32, #tpu.memory_space<any>> -> memref<1x128xf32, #tpu.memory_space<any>>
    %47 = tpu.memref_squeeze %46 : memref<1x128xf32, #tpu.memory_space<any>> -> memref<128xf32, #tpu.memory_space<any>>
    %c0_i32_18 = arith.constant 0 : i32
    %48 = tpu.memref_slice %arg4[%c4_i32_16, %c0_i32_18] : memref<8x128xf32, #tpu.memory_space<vmem>> -> memref<1x128xf32, #tpu.memory_space<vmem>>
    %49 = tpu.memref_squeeze %48 : memref<1x128xf32, #tpu.memory_space<vmem>> -> memref<128xf32, #tpu.memory_space<vmem>>
    %50 = tpu.memref_slice %arg5[%c4_i32_17] : memref<8x!tpu.dma_semaphore, #tpu.memory_space<semaphore_mem>> -> memref<1x!tpu.dma_semaphore, #tpu.memory_space<semaphore_mem>>
    %51 = tpu.memref_squeeze %50 : memref<1x!tpu.dma_semaphore, #tpu.memory_space<semaphore_mem>> -> memref<!tpu.dma_semaphore, #tpu.memory_space<semaphore_mem>>
    tpu.enqueue_dma source(%47 : memref<128xf32, #tpu.memory_space<any>>) target(%49 : memref<128xf32, #tpu.memory_space<vmem>>) target_semaphore(%51 : memref<!tpu.dma_semaphore, #tpu.memory_space<semaphore_mem>>)
    %c8_i32_19 = arith.constant 8 : i32
    %52 = arith.muli %arg0, %c8_i32_19 : i32
    %c5_i32 = arith.constant 5 : i32
    %53 = arith.addi %52, %c5_i32 : i32
    %54 = arith.index_cast %53 : i32 to index
    %55 = memref.load %arg2[%54] : memref<16xi32, #tpu.memory_space<smem>>
    %c5_i32_20 = arith.constant 5 : i32
    %c5_i32_21 = arith.constant 5 : i32
    %56 = tpu.memref_slice %arg3[%55, %1] : memref<8x128xf32, #tpu.memory_space<any>> -> memref<1x128xf32, #tpu.memory_space<any>>
    %57 = tpu.memref_squeeze %56 : memref<1x128xf32, #tpu.memory_space<any>> -> memref<128xf32, #tpu.memory_space<any>>
    %c0_i32_22 = arith.constant 0 : i32
    %58 = tpu.memref_slice %arg4[%c5_i32_20, %c0_i32_22] : memref<8x128xf32, #tpu.memory_space<vmem>> -> memref<1x128xf32, #tpu.memory_space<vmem>>
    %59 = tpu.memref_squeeze %58 : memref<1x128xf32, #tpu.memory_space<vmem>> -> memref<128xf32, #tpu.memory_space<vmem>>
    %60 = tpu.memref_slice %arg5[%c5_i32_21] : memref<8x!tpu.dma_semaphore, #tpu.memory_space<semaphore_mem>> -> memref<1x!tpu.dma_semaphore, #tpu.memory_space<semaphore_mem>>
    %61 = tpu.memref_squeeze %60 : memref<1x!tpu.dma_semaphore, #tpu.memory_space<semaphore_mem>> -> memref<!tpu.dma_semaphore, #tpu.memory_space<semaphore_mem>>
    tpu.enqueue_dma source(%57 : memref<128xf32, #tpu.memory_space<any>>) target(%59 : memref<128xf32, #tpu.memory_space<vmem>>) target_semaphore(%61 : memref<!tpu.dma_semaphore, #tpu.memory_space<semaphore_mem>>)
    %c8_i32_23 = arith.constant 8 : i32
    %62 = arith.muli %arg0, %c8_i32_23 : i32
    %c6_i32 = arith.constant 6 : i32
    %63 = arith.addi %62, %c6_i32 : i32
    %64 = arith.index_cast %63 : i32 to index
    %65 = memref.load %arg2[%64] : memref<16xi32, #tpu.memory_space<smem>>
    %c6_i32_24 = arith.constant 6 : i32
    %c6_i32_25 = arith.constant 6 : i32
    %66 = tpu.memref_slice %arg3[%65, %1] : memref<8x128xf32, #tpu.memory_space<any>> -> memref<1x128xf32, #tpu.memory_space<any>>
    %67 = tpu.memref_squeeze %66 : memref<1x128xf32, #tpu.memory_space<any>> -> memref<128xf32, #tpu.memory_space<any>>
    %c0_i32_26 = arith.constant 0 : i32
    %68 = tpu.memref_slice %arg4[%c6_i32_24, %c0_i32_26] : memref<8x128xf32, #tpu.memory_space<vmem>> -> memref<1x128xf32, #tpu.memory_space<vmem>>
    %69 = tpu.memref_squeeze %68 : memref<1x128xf32, #tpu.memory_space<vmem>> -> memref<128xf32, #tpu.memory_space<vmem>>
    %70 = tpu.memref_slice %arg5[%c6_i32_25] : memref<8x!tpu.dma_semaphore, #tpu.memory_space<semaphore_mem>> -> memref<1x!tpu.dma_semaphore, #tpu.memory_space<semaphore_mem>>
    %71 = tpu.memref_squeeze %70 : memref<1x!tpu.dma_semaphore, #tpu.memory_space<semaphore_mem>> -> memref<!tpu.dma_semaphore, #tpu.memory_space<semaphore_mem>>
    tpu.enqueue_dma source(%67 : memref<128xf32, #tpu.memory_space<any>>) target(%69 : memref<128xf32, #tpu.memory_space<vmem>>) target_semaphore(%71 : memref<!tpu.dma_semaphore, #tpu.memory_space<semaphore_mem>>)
    %c8_i32_27 = arith.constant 8 : i32
    %72 = arith.muli %arg0, %c8_i32_27 : i32
    %c7_i32 = arith.constant 7 : i32
    %73 = arith.addi %72, %c7_i32 : i32
    %74 = arith.index_cast %73 : i32 to index
    %75 = memref.load %arg2[%74] : memref<16xi32, #tpu.memory_space<smem>>
    %c7_i32_28 = arith.constant 7 : i32
    %c7_i32_29 = arith.constant 7 : i32
    %76 = tpu.memref_slice %arg3[%75, %1] : memref<8x128xf32, #tpu.memory_space<any>> -> memref<1x128xf32, #tpu.memory_space<any>>
    %77 = tpu.memref_squeeze %76 : memref<1x128xf32, #tpu.memory_space<any>> -> memref<128xf32, #tpu.memory_space<any>>
    %c0_i32_30 = arith.constant 0 : i32
    %78 = tpu.memref_slice %arg4[%c7_i32_28, %c0_i32_30] : memref<8x128xf32, #tpu.memory_space<vmem>> -> memref<1x128xf32, #tpu.memory_space<vmem>>
    %79 = tpu.memref_squeeze %78 : memref<1x128xf32, #tpu.memory_space<vmem>> -> memref<128xf32, #tpu.memory_space<vmem>>
    %80 = tpu.memref_slice %arg5[%c7_i32_29] : memref<8x!tpu.dma_semaphore, #tpu.memory_space<semaphore_mem>> -> memref<1x!tpu.dma_semaphore, #tpu.memory_space<semaphore_mem>>
    %81 = tpu.memref_squeeze %80 : memref<1x!tpu.dma_semaphore, #tpu.memory_space<semaphore_mem>> -> memref<!tpu.dma_semaphore, #tpu.memory_space<semaphore_mem>>
    tpu.enqueue_dma source(%77 : memref<128xf32, #tpu.memory_space<any>>) target(%79 : memref<128xf32, #tpu.memory_space<vmem>>) target_semaphore(%81 : memref<!tpu.dma_semaphore, #tpu.memory_space<semaphore_mem>>)
    %c8_i32_31 = arith.constant 8 : i32
    %82 = arith.muli %arg0, %c8_i32_31 : i32
    %c0_i32_32 = arith.constant 0 : i32
    %83 = arith.addi %82, %c0_i32_32 : i32
    %84 = arith.index_cast %83 : i32 to index
    %85 = memref.load %arg2[%84] : memref<16xi32, #tpu.memory_space<smem>>
    %c0_i32_33 = arith.constant 0 : i32
    %c0_i32_34 = arith.constant 0 : i32
    %86 = tpu.memref_slice %arg3[%85, %1] : memref<8x128xf32, #tpu.memory_space<any>> -> memref<1x128xf32, #tpu.memory_space<any>>
    %87 = tpu.memref_squeeze %86 : memref<1x128xf32, #tpu.memory_space<any>> -> memref<128xf32, #tpu.memory_space<any>>
    %c0_i32_35 = arith.constant 0 : i32
    %88 = tpu.memref_slice %arg4[%c0_i32_33, %c0_i32_35] : memref<8x128xf32, #tpu.memory_space<vmem>> -> memref<1x128xf32, #tpu.memory_space<vmem>>
    %89 = tpu.memref_squeeze %88 : memref<1x128xf32, #tpu.memory_space<vmem>> -> memref<128xf32, #tpu.memory_space<vmem>>
    %90 = tpu.memref_slice %arg5[%c0_i32_34] : memref<8x!tpu.dma_semaphore, #tpu.memory_space<semaphore_mem>> -> memref<1x!tpu.dma_semaphore, #tpu.memory_space<semaphore_mem>>
    %91 = tpu.memref_squeeze %90 : memref<1x!tpu.dma_semaphore, #tpu.memory_space<semaphore_mem>> -> memref<!tpu.dma_semaphore, #tpu.memory_space<semaphore_mem>>
    tpu.wait_dma2 semaphore(%91 : memref<!tpu.dma_semaphore, #tpu.memory_space<semaphore_mem>>) src(%87 : memref<128xf32, #tpu.memory_space<any>>) dst(%89 : memref<128xf32, #tpu.memory_space<vmem>>)
    %c8_i32_36 = arith.constant 8 : i32
    %92 = arith.muli %arg0, %c8_i32_36 : i32
    %c1_i32_37 = arith.constant 1 : i32
    %93 = arith.addi %92, %c1_i32_37 : i32
    %94 = arith.index_cast %93 : i32 to index
    %95 = memref.load %arg2[%94] : memref<16xi32, #tpu.memory_space<smem>>
    %c1_i32_38 = arith.constant 1 : i32
    %c1_i32_39 = arith.constant 1 : i32
    %96 = tpu.memref_slice %arg3[%95, %1] : memref<8x128xf32, #tpu.memory_space<any>> -> memref<1x128xf32, #tpu.memory_space<any>>
    %97 = tpu.memref_squeeze %96 : memref<1x128xf32, #tpu.memory_space<any>> -> memref<128xf32, #tpu.memory_space<any>>
    %c0_i32_40 = arith.constant 0 : i32
    %98 = tpu.memref_slice %arg4[%c1_i32_38, %c0_i32_40] : memref<8x128xf32, #tpu.memory_space<vmem>> -> memref<1x128xf32, #tpu.memory_space<vmem>>
    %99 = tpu.memref_squeeze %98 : memref<1x128xf32, #tpu.memory_space<vmem>> -> memref<128xf32, #tpu.memory_space<vmem>>
    %100 = tpu.memref_slice %arg5[%c1_i32_39] : memref<8x!tpu.dma_semaphore, #tpu.memory_space<semaphore_mem>> -> memref<1x!tpu.dma_semaphore, #tpu.memory_space<semaphore_mem>>
    %101 = tpu.memref_squeeze %100 : memref<1x!tpu.dma_semaphore, #tpu.memory_space<semaphore_mem>> -> memref<!tpu.dma_semaphore, #tpu.memory_space<semaphore_mem>>
    tpu.wait_dma2 semaphore(%101 : memref<!tpu.dma_semaphore, #tpu.memory_space<semaphore_mem>>) src(%97 : memref<128xf32, #tpu.memory_space<any>>) dst(%99 : memref<128xf32, #tpu.memory_space<vmem>>)
    %c8_i32_41 = arith.constant 8 : i32
    %102 = arith.muli %arg0, %c8_i32_41 : i32
    %c2_i32_42 = arith.constant 2 : i32
    %103 = arith.addi %102, %c2_i32_42 : i32
    %104 = arith.index_cast %103 : i32 to index
    %105 = memref.load %arg2[%104] : memref<16xi32, #tpu.memory_space<smem>>
    %c2_i32_43 = arith.constant 2 : i32
    %c2_i32_44 = arith.constant 2 : i32
    %106 = tpu.memref_slice %arg3[%105, %1] : memref<8x128xf32, #tpu.memory_space<any>> -> memref<1x128xf32, #tpu.memory_space<any>>
    %107 = tpu.memref_squeeze %106 : memref<1x128xf32, #tpu.memory_space<any>> -> memref<128xf32, #tpu.memory_space<any>>
    %c0_i32_45 = arith.constant 0 : i32
    %108 = tpu.memref_slice %arg4[%c2_i32_43, %c0_i32_45] : memref<8x128xf32, #tpu.memory_space<vmem>> -> memref<1x128xf32, #tpu.memory_space<vmem>>
    %109 = tpu.memref_squeeze %108 : memref<1x128xf32, #tpu.memory_space<vmem>> -> memref<128xf32, #tpu.memory_space<vmem>>
    %110 = tpu.memref_slice %arg5[%c2_i32_44] : memref<8x!tpu.dma_semaphore, #tpu.memory_space<semaphore_mem>> -> memref<1x!tpu.dma_semaphore, #tpu.memory_space<semaphore_mem>>
    %111 = tpu.memref_squeeze %110 : memref<1x!tpu.dma_semaphore, #tpu.memory_space<semaphore_mem>> -> memref<!tpu.dma_semaphore, #tpu.memory_space<semaphore_mem>>
    tpu.wait_dma2 semaphore(%111 : memref<!tpu.dma_semaphore, #tpu.memory_space<semaphore_mem>>) src(%107 : memref<128xf32, #tpu.memory_space<any>>) dst(%109 : memref<128xf32, #tpu.memory_space<vmem>>)
    %c8_i32_46 = arith.constant 8 : i32
    %112 = arith.muli %arg0, %c8_i32_46 : i32
    %c3_i32_47 = arith.constant 3 : i32
    %113 = arith.addi %112, %c3_i32_47 : i32
    %114 = arith.index_cast %113 : i32 to index
    %115 = memref.load %arg2[%114] : memref<16xi32, #tpu.memory_space<smem>>
    %c3_i32_48 = arith.constant 3 : i32
    %c3_i32_49 = arith.constant 3 : i32
    %116 = tpu.memref_slice %arg3[%115, %1] : memref<8x128xf32, #tpu.memory_space<any>> -> memref<1x128xf32, #tpu.memory_space<any>>
    %117 = tpu.memref_squeeze %116 : memref<1x128xf32, #tpu.memory_space<any>> -> memref<128xf32, #tpu.memory_space<any>>
    %c0_i32_50 = arith.constant 0 : i32
    %118 = tpu.memref_slice %arg4[%c3_i32_48, %c0_i32_50] : memref<8x128xf32, #tpu.memory_space<vmem>> -> memref<1x128xf32, #tpu.memory_space<vmem>>
    %119 = tpu.memref_squeeze %118 : memref<1x128xf32, #tpu.memory_space<vmem>> -> memref<128xf32, #tpu.memory_space<vmem>>
    %120 = tpu.memref_slice %arg5[%c3_i32_49] : memref<8x!tpu.dma_semaphore, #tpu.memory_space<semaphore_mem>> -> memref<1x!tpu.dma_semaphore, #tpu.memory_space<semaphore_mem>>
    %121 = tpu.memref_squeeze %120 : memref<1x!tpu.dma_semaphore, #tpu.memory_space<semaphore_mem>> -> memref<!tpu.dma_semaphore, #tpu.memory_space<semaphore_mem>>
    tpu.wait_dma2 semaphore(%121 : memref<!tpu.dma_semaphore, #tpu.memory_space<semaphore_mem>>) src(%117 : memref<128xf32, #tpu.memory_space<any>>) dst(%119 : memref<128xf32, #tpu.memory_space<vmem>>)
    %c8_i32_51 = arith.constant 8 : i32
    %122 = arith.muli %arg0, %c8_i32_51 : i32
    %c4_i32_52 = arith.constant 4 : i32
    %123 = arith.addi %122, %c4_i32_52 : i32
    %124 = arith.index_cast %123 : i32 to index
    %125 = memref.load %arg2[%124] : memref<16xi32, #tpu.memory_space<smem>>
    %c4_i32_53 = arith.constant 4 : i32
    %c4_i32_54 = arith.constant 4 : i32
    %126 = tpu.memref_slice %arg3[%125, %1] : memref<8x128xf32, #tpu.memory_space<any>> -> memref<1x128xf32, #tpu.memory_space<any>>
    %127 = tpu.memref_squeeze %126 : memref<1x128xf32, #tpu.memory_space<any>> -> memref<128xf32, #tpu.memory_space<any>>
    %c0_i32_55 = arith.constant 0 : i32
    %128 = tpu.memref_slice %arg4[%c4_i32_53, %c0_i32_55] : memref<8x128xf32, #tpu.memory_space<vmem>> -> memref<1x128xf32, #tpu.memory_space<vmem>>
    %129 = tpu.memref_squeeze %128 : memref<1x128xf32, #tpu.memory_space<vmem>> -> memref<128xf32, #tpu.memory_space<vmem>>
    %130 = tpu.memref_slice %arg5[%c4_i32_54] : memref<8x!tpu.dma_semaphore, #tpu.memory_space<semaphore_mem>> -> memref<1x!tpu.dma_semaphore, #tpu.memory_space<semaphore_mem>>
    %131 = tpu.memref_squeeze %130 : memref<1x!tpu.dma_semaphore, #tpu.memory_space<semaphore_mem>> -> memref<!tpu.dma_semaphore, #tpu.memory_space<semaphore_mem>>
    tpu.wait_dma2 semaphore(%131 : memref<!tpu.dma_semaphore, #tpu.memory_space<semaphore_mem>>) src(%127 : memref<128xf32, #tpu.memory_space<any>>) dst(%129 : memref<128xf32, #tpu.memory_space<vmem>>)
    %c8_i32_56 = arith.constant 8 : i32
    %132 = arith.muli %arg0, %c8_i32_56 : i32
    %c5_i32_57 = arith.constant 5 : i32
    %133 = arith.addi %132, %c5_i32_57 : i32
    %134 = arith.index_cast %133 : i32 to index
    %135 = memref.load %arg2[%134] : memref<16xi32, #tpu.memory_space<smem>>
    %c5_i32_58 = arith.constant 5 : i32
    %c5_i32_59 = arith.constant 5 : i32
    %136 = tpu.memref_slice %arg3[%135, %1] : memref<8x128xf32, #tpu.memory_space<any>> -> memref<1x128xf32, #tpu.memory_space<any>>
    %137 = tpu.memref_squeeze %136 : memref<1x128xf32, #tpu.memory_space<any>> -> memref<128xf32, #tpu.memory_space<any>>
    %c0_i32_60 = arith.constant 0 : i32
    %138 = tpu.memref_slice %arg4[%c5_i32_58, %c0_i32_60] : memref<8x128xf32, #tpu.memory_space<vmem>> -> memref<1x128xf32, #tpu.memory_space<vmem>>
    %139 = tpu.memref_squeeze %138 : memref<1x128xf32, #tpu.memory_space<vmem>> -> memref<128xf32, #tpu.memory_space<vmem>>
    %140 = tpu.memref_slice %arg5[%c5_i32_59] : memref<8x!tpu.dma_semaphore, #tpu.memory_space<semaphore_mem>> -> memref<1x!tpu.dma_semaphore, #tpu.memory_space<semaphore_mem>>
    %141 = tpu.memref_squeeze %140 : memref<1x!tpu.dma_semaphore, #tpu.memory_space<semaphore_mem>> -> memref<!tpu.dma_semaphore, #tpu.memory_space<semaphore_mem>>
    tpu.wait_dma2 semaphore(%141 : memref<!tpu.dma_semaphore, #tpu.memory_space<semaphore_mem>>) src(%137 : memref<128xf32, #tpu.memory_space<any>>) dst(%139 : memref<128xf32, #tpu.memory_space<vmem>>)
    %c8_i32_61 = arith.constant 8 : i32
    %142 = arith.muli %arg0, %c8_i32_61 : i32
    %c6_i32_62 = arith.constant 6 : i32
    %143 = arith.addi %142, %c6_i32_62 : i32
    %144 = arith.index_cast %143 : i32 to index
    %145 = memref.load %arg2[%144] : memref<16xi32, #tpu.memory_space<smem>>
    %c6_i32_63 = arith.constant 6 : i32
    %c6_i32_64 = arith.constant 6 : i32
    %146 = tpu.memref_slice %arg3[%145, %1] : memref<8x128xf32, #tpu.memory_space<any>> -> memref<1x128xf32, #tpu.memory_space<any>>
    %147 = tpu.memref_squeeze %146 : memref<1x128xf32, #tpu.memory_space<any>> -> memref<128xf32, #tpu.memory_space<any>>
    %c0_i32_65 = arith.constant 0 : i32
    %148 = tpu.memref_slice %arg4[%c6_i32_63, %c0_i32_65] : memref<8x128xf32, #tpu.memory_space<vmem>> -> memref<1x128xf32, #tpu.memory_space<vmem>>
    %149 = tpu.memref_squeeze %148 : memref<1x128xf32, #tpu.memory_space<vmem>> -> memref<128xf32, #tpu.memory_space<vmem>>
    %150 = tpu.memref_slice %arg5[%c6_i32_64] : memref<8x!tpu.dma_semaphore, #tpu.memory_space<semaphore_mem>> -> memref<1x!tpu.dma_semaphore, #tpu.memory_space<semaphore_mem>>
    %151 = tpu.memref_squeeze %150 : memref<1x!tpu.dma_semaphore, #tpu.memory_space<semaphore_mem>> -> memref<!tpu.dma_semaphore, #tpu.memory_space<semaphore_mem>>
    tpu.wait_dma2 semaphore(%151 : memref<!tpu.dma_semaphore, #tpu.memory_space<semaphore_mem>>) src(%147 : memref<128xf32, #tpu.memory_space<any>>) dst(%149 : memref<128xf32, #tpu.memory_space<vmem>>)
    %c8_i32_66 = arith.constant 8 : i32
    %152 = arith.muli %arg0, %c8_i32_66 : i32
    %c7_i32_67 = arith.constant 7 : i32
    %153 = arith.addi %152, %c7_i32_67 : i32
    %154 = arith.index_cast %153 : i32 to index
    %155 = memref.load %arg2[%154] : memref<16xi32, #tpu.memory_space<smem>>
    %c7_i32_68 = arith.constant 7 : i32
    %c7_i32_69 = arith.constant 7 : i32
    %156 = tpu.memref_slice %arg3[%155, %1] : memref<8x128xf32, #tpu.memory_space<any>> -> memref<1x128xf32, #tpu.memory_space<any>>
    %157 = tpu.memref_squeeze %156 : memref<1x128xf32, #tpu.memory_space<any>> -> memref<128xf32, #tpu.memory_space<any>>
    %c0_i32_70 = arith.constant 0 : i32
    %158 = tpu.memref_slice %arg4[%c7_i32_68, %c0_i32_70] : memref<8x128xf32, #tpu.memory_space<vmem>> -> memref<1x128xf32, #tpu.memory_space<vmem>>
    %159 = tpu.memref_squeeze %158 : memref<1x128xf32, #tpu.memory_space<vmem>> -> memref<128xf32, #tpu.memory_space<vmem>>
    %160 = tpu.memref_slice %arg5[%c7_i32_69] : memref<8x!tpu.dma_semaphore, #tpu.memory_space<semaphore_mem>> -> memref<1x!tpu.dma_semaphore, #tpu.memory_space<semaphore_mem>>
    %161 = tpu.memref_squeeze %160 : memref<1x!tpu.dma_semaphore, #tpu.memory_space<semaphore_mem>> -> memref<!tpu.dma_semaphore, #tpu.memory_space<semaphore_mem>>
    tpu.wait_dma2 semaphore(%161 : memref<!tpu.dma_semaphore, #tpu.memory_space<semaphore_mem>>) src(%157 : memref<128xf32, #tpu.memory_space<any>>) dst(%159 : memref<128xf32, #tpu.memory_space<vmem>>)
    return
  }
  func.func @transform_1(%arg0: i32, %arg1: i32, %arg2: memref<16xi32, #tpu.memory_space<smem>>) -> (i32, i32) {
    %c0_i32 = arith.constant 0 : i32
    return %arg0, %arg1 : i32, i32
  }
}

</mosaic_0001>

<llo_original>
// kernel: tpu_custom_call.1
$region0: #{tpu_custom_call.1}
  #allocation0 [shape = 'u32[]', space=smem, size = 0x4, offset = 0x4, fixed_abs, tag = 'smem constant byte address 0x4 - core index']
  #allocation1 [shape = 'u32[144,128]{1,0:T(1,128)}', space=vmem, size = 0x12000, scoped, tag = 'internal scratch']
  #allocation2 [shape = 's32[8]{0}', space=sflag, size = 0x20, scoped, tag = 'scratch operand']
  #allocation3 [shape = 's32[1]{0}', space=sflag, size = 0x4, scoped, tag = 'scoped memory for tpu_custom_call.1']
  #allocation4 [shape = 'u8[512]{0}', space=smem, size = 0x200, scoped, tag = 'prefetched SMEM operand 0']
  #allocation7 [shape = 's32[]', space=sflag, size = 0x4, offset = 0, fixed_abs, tag = 'sflag constant byte address 0x0 - dummy sync flag']
  #allocation8 [shape = 's32[]', space=sflag, size = 0x4, offset = 0, fixed_abs, tag = 'sflag constant byte address 0x0 - dummy sync flag']
  #allocation9 [shape = 'u32[]', space=smem, size = 0x4, offset = 0x44, fixed_abs, tag = 'smem constant byte address 0x44 - assertion arg 0']
  #allocation10 [shape = 'u32[]', space=smem, size = 0x4, offset = 0x48, fixed_abs, tag = 'smem constant byte address 0x48 - assertion arg 1']
  #allocation11 [shape = 's32[]', space=sflag, size = 0x4, offset = 0, fixed_abs, tag = 'sflag constant byte address 0x0 - dummy sync flag']
  #allocation12 [shape = 's32[]', space=sflag, size = 0x4, offset = 0, fixed_abs, tag = 'sflag constant byte address 0x0 - dummy sync flag']
  #allocation13 [shape = 's32[]', space=sflag, size = 0x4, offset = 0, fixed_abs, tag = 'sflag constant byte address 0x0 - dummy sync flag']
  #allocation14 [shape = 's32[]', space=sflag, size = 0x4, offset = 0, fixed_abs, tag = 'sflag constant byte address 0x0 - dummy sync flag']
  #allocation15 [shape = 's32[]', space=sflag, size = 0x4, offset = 0, fixed_abs, tag = 'sflag constant byte address 0x0 - dummy sync flag']
  #allocation16 [shape = 's32[]', space=sflag, size = 0x4, offset = 0, fixed_abs, tag = 'sflag constant byte address 0x0 - dummy sync flag']
  #allocation17 [shape = 's32[]', space=sflag, size = 0x4, offset = 0, fixed_abs, tag = 'sflag constant byte address 0x0 - dummy sync flag']
  #allocation18 [shape = 's32[]', space=sflag, size = 0x4, offset = 0, fixed_abs, tag = 'sflag constant byte address 0x0 - dummy sync flag']
  #allocation19 [shape = 's32[]', space=sflag, size = 0x4, offset = 0, fixed_abs, tag = 'sflag constant byte address 0x0 - dummy sync flag']
  #allocation20 [shape = 's32[]', space=sflag, size = 0x4, offset = 0, fixed_abs, tag = 'sflag constant byte address 0x0 - dummy sync flag']
  #allocation21 [shape = 's32[]', space=sflag, size = 0x4, offset = 0, fixed_abs, tag = 'sflag constant byte address 0x0 - dummy sync flag']
  #allocation22 [shape = 's32[]', space=sflag, size = 0x4, offset = 0, fixed_abs, tag = 'sflag constant byte address 0x0 - dummy sync flag']
  #allocation23 [shape = 's32[]', space=sflag, size = 0x4, offset = 0, fixed_abs, tag = 'sflag constant byte address 0x0 - dummy sync flag']
  #allocation24 [shape = 's32[]', space=sflag, size = 0x4, offset = 0, fixed_abs, tag = 'sflag constant byte address 0x0 - dummy sync flag']
  %s0 = inlined_call_operand.hbm [shape: s32[16], index: 0, kind: input, shape index: {}]
  %s1 = inlined_call_operand.hbm [shape: f32[8,128], index: 1, kind: input, shape index: {}]
  %s2 = inlined_call_operand.hbm [shape: f32[16,128], index: 2, kind: output, shape index: {}]
  %s3 = sld [smem:[#allocation0]]
  $region57: #{tpu_custom_call.1} parent=0
    _
  %s5 = ssub.s32 1, %s3
  %s6 = scalar_select 0, %s5, %s3
  %8 = dma.hbm_to_smem %s0, 16, [#allocation4], [#allocation3]
  %9 = dma.done [#allocation3], 16
  %10 = sfence
  $region1: #{tpu_custom_call.1} parent=0
    #allocation5 [shape = 'u8[8192]{0}', space=vmem, size = 0x2000, scoped, tag = 'output window, operand 0']
    #allocation6 [shape = 's32[2]{0}', space=sflag, size = 0x8, scoped, tag = 'scoped memory for tpu_custom_call.1']
    %11 = vsyncpa [#allocation6], 0
    %s12 = scalar_lea.sflag [#allocation6], 1
    %13 = vsyncpa %s12, 0
    loop: start=0, step=1, limit=3
    $region2: #{tpu_custom_call.1} parent=1 // loop_pre_header
      _
    $region3: #{tpu_custom_call.1} parent=1 // loop_header
      %s15 = sphi 0, %s19
      %p16 = scmp.ge.s32.totalorder %s15, 3
      %s21 = sphi 0, %s31
      %s22 = sphi 0, %s27
      %s23 = sphi 0, %s21
      %s24 = sphi 0, %s22
      %s36 = sphi 0, %s38
      %s39 = sphi 0, %s36
      %s49 = sphi 0, %s39
    $region4: #{tpu_custom_call.1} parent=1 // loop_header_branch
      %18 = sbr.rel (%p16) target = $region8
    $region5: #{tpu_custom_call.1} parent=1 // loop_body
      %s20 = ssub.s32 %s15, 1
      %s25 = sadd.s32 1, %s22
      %p26 = scmp.ge.s32.totalorder %s25, 1
      %s27 = scalar_select %p26, 0, %s25
      %s28 = sadd.s32 1, %s21
      %s29 = scalar_select %p26, %s28, %s21
      %p30 = scmp.ge.s32.totalorder %s29, 2
      %s31 = scalar_select %p30, 0, %s29
      %s32 = ssub.s32 %s21, %s31
      %s33 = ssub.s32 %s22, %s27
      %s34 = sor.u32 %s32, %s33
      %p35 = scmp.eq.s32.totalorder %s34, 0
      %s37 = sadd.s32 %s36, 1
      %s38 = scalar_select %p35, %s36, %s37
      %p40 = pneg %p35
      %p41 = scmp.eq.s32.totalorder %s15, 1
      %p42 = por %p40, %p41
      %p43 = scmp.ne.s32.totalorder %s36, %s39
      %p44 = scmp.eq.s32.totalorder %s15, 0
      %p45 = por %p43, %p44
      %p46 = scmp.ne.s32.totalorder %s36, %s39
      %p47 = scmp.eq.s32.totalorder %s20, 1
      %p48 = por %p46, %p47
      %p50 = scmp.ne.s32.totalorder %s39, %s49
      %p51 = scmp.eq.s32.totalorder %s20, 0
      %p52 = por %p50, %p51
      %p53 = scmp.lt.s32.totalorder %s15, 2
      // Predicated region
      $region9: #{tpu_custom_call.1} parent=5 // pred_check
        %p54 = pneg %p53
      $region10: #{tpu_custom_call.1} parent=5 // pred_check_branch
        %56 = sbr.rel (%p54) target = $region12
      $region11: #{tpu_custom_call.1} parent=5 // pred_region
        %p57 = pneg %p45
        %p58 = pneg %p42
        %s59 = sand.u32 %s36, 1
        %s60 = scalar_lea.sflag [#allocation6], %s59
        %s61 = sand.u32 %s36, 1
        %s62 = smul.addr %s61, 8
        %s63 = scalar_lea.vmem [#allocation5], %s62
        %s64 = smul.u32 %s22, 128
        %s65 = smul.u32 %s21, 8
        %s66 = sld [smem:[#allocation4 + %s65]]
        %s67 = sshra.s32 %s64, 7
        %s68 = sand.u32 %s64, 127
        %s69 = sadd.s32 %s67, %s66
        %s70 = smul.addr %s69, 16
        %s71 = scalar_lea.hbm %s1, %s70
        // Predicated region
        $region13: #{tpu_custom_call.1} parent=11 // pred_check
          _
        $region14: #{tpu_custom_call.1} parent=11 // pred_check_branch
          %73 = sbr.rel target = $region16
        $region15: #{tpu_custom_call.1} parent=11 // pred_region
          %74 = sst [smem:[#allocation9]] [#allocation8]
          %75 = sst [smem:[#allocation10]] [#allocation7]
        $region16: #{tpu_custom_call.1} parent=11 // pred_fallthru
          _
        %77 = shalt.err (0)
        %s79 = sshll.u32 %s63, 4
        %s80 = int_to_ptr.vmem [resolvable:$true] %s79
        %82 = dma.hbm_to_vmem [thread:$0]  %s71, 16, %s80, [#allocation2]
        %s83 = sadd.s32 %s65, 1
        %s84 = sld [smem:[#allocation4 + %s83]]
        %s85 = sadd.s32 %s67, %s84
        %s86 = smul.addr %s85, 16
        %s87 = scalar_lea.hbm %s1, %s86
        %s88 = scalar_lea.vmem %s63, 1 [#allocation5]
        %s89 = scalar_lea.sflag [#allocation2], 1
        // Predicated region
        $region17: #{tpu_custom_call.1} parent=11 // pred_check
          _
        $region18: #{tpu_custom_call.1} parent=11 // pred_check_branch
          %91 = sbr.rel target = $region20
        $region19: #{tpu_custom_call.1} parent=11 // pred_region
          %92 = sst [smem:[#allocation9]] [#allocation12]
          %93 = sst [smem:[#allocation10]] [#allocation11]
        $region20: #{tpu_custom_call.1} parent=11 // pred_fallthru
          _
        %95 = shalt.err (0)
        %s97 = sshll.u32 %s88, 4
        %s98 = int_to_ptr.vmem [resolvable:$true] %s97
        %100 = dma.hbm_to_vmem [thread:$0]  %s87, 16, %s98, %s89
        %s101 = sadd.s32 %s65, 2
        %s102 = sld [smem:[#allocation4 + %s101]]
        %s103 = sadd.s32 %s67, %s102
        %s104 = smul.addr %s103, 16
        %s105 = scalar_lea.hbm %s1, %s104
        %s106 = scalar_lea.vmem %s63, 2 [#allocation5]
        %s107 = scalar_lea.sflag [#allocation2], 2
        // Predicated region
        $region21: #{tpu_custom_call.1} parent=11 // pred_check
          _
        $region22: #{tpu_custom_call.1} parent=11 // pred_check_branch
          %109 = sbr.rel target = $region24
        $region23: #{tpu_custom_call.1} parent=11 // pred_region
          %110 = sst [smem:[#allocation9]] [#allocation14]
          %111 = sst [smem:[#allocation10]] [#allocation13]
        $region24: #{tpu_custom_call.1} parent=11 // pred_fallthru
          _
        %113 = shalt.err (0)
        %s115 = sshll.u32 %s106, 4
        %s116 = int_to_ptr.vmem [resolvable:$true] %s115
        %118 = dma.hbm_to_vmem [thread:$0]  %s105, 16, %s116, %s107
        %s119 = sadd.s32 %s65, 3
        %s120 = sld [smem:[#allocation4 + %s119]]
        %s121 = sadd.s32 %s67, %s120
        %s122 = smul.addr %s121, 16
        %s123 = scalar_lea.hbm %s1, %s122
        %s124 = scalar_lea.vmem %s63, 3 [#allocation5]
        %s125 = scalar_lea.sflag [#allocation2], 3
        // Predicated region
        $region25: #{tpu_custom_call.1} parent=11 // pred_check
          _
        $region26: #{tpu_custom_call.1} parent=11 // pred_check_branch
          %127 = sbr.rel target = $region28
        $region27: #{tpu_custom_call.1} parent=11 // pred_region
          %128 = sst [smem:[#allocation9]] [#allocation16]
          %129 = sst [smem:[#allocation10]] [#allocation15]
        $region28: #{tpu_custom_call.1} parent=11 // pred_fallthru
          _
        %131 = shalt.err (0)
        %s133 = sshll.u32 %s124, 4
        %s134 = int_to_ptr.vmem [resolvable:$true] %s133
        %136 = dma.hbm_to_vmem [thread:$0]  %s123, 16, %s134, %s125
        %s137 = sadd.s32 %s65, 4
        %s138 = sld [smem:[#allocation4 + %s137]]
        %s139 = sadd.s32 %s67, %s138
        %s140 = smul.addr %s139, 16
        %s141 = scalar_lea.hbm %s1, %s140
        %s142 = scalar_lea.vmem %s63, 4 [#allocation5]
        %s143 = scalar_lea.sflag [#allocation2], 4
        // Predicated region
        $region29: #{tpu_custom_call.1} parent=11 // pred_check
          _
        $region30: #{tpu_custom_call.1} parent=11 // pred_check_branch
          %145 = sbr.rel target = $region32
        $region31: #{tpu_custom_call.1} parent=11 // pred_region
          %146 = sst [smem:[#allocation9]] [#allocation18]
          %147 = sst [smem:[#allocation10]] [#allocation17]
        $region32: #{tpu_custom_call.1} parent=11 // pred_fallthru
          _
        %149 = shalt.err (0)
        %s151 = sshll.u32 %s142, 4
        %s152 = int_to_ptr.vmem [resolvable:$true] %s151
        %154 = dma.hbm_to_vmem [thread:$0]  %s141, 16, %s152, %s143
        %s155 = sadd.s32 %s65, 5
        %s156 = sld [smem:[#allocation4 + %s155]]
        %s157 = sadd.s32 %s67, %s156
        %s158 = smul.addr %s157, 16
        %s159 = scalar_lea.hbm %s1, %s158
        %s160 = scalar_lea.vmem %s63, 5 [#allocation5]
        %s161 = scalar_lea.sflag [#allocation2], 5
        // Predicated region
        $region33: #{tpu_custom_call.1} parent=11 // pred_check
          _
        $region34: #{tpu_custom_call.1} parent=11 // pred_check_branch
          %163 = sbr.rel target = $region36
        $region35: #{tpu_custom_call.1} parent=11 // pred_region
          %164 = sst [smem:[#allocation9]] [#allocation20]
          %165 = sst [smem:[#allocation10]] [#allocation19]
        $region36: #{tpu_custom_call.1} parent=11 // pred_fallthru
          _
        %167 = shalt.err (0)
        %s169 = sshll.u32 %s160, 4
        %s170 = int_to_ptr.vmem [resolvable:$true] %s169
        %172 = dma.hbm_to_vmem [thread:$0]  %s159, 16, %s170, %s161
        %s173 = sadd.s32 %s65, 6
        %s174 = sld [smem:[#allocation4 + %s173]]
        %s175 = sadd.s32 %s67, %s174
        %s176 = smul.addr %s175, 16
        %s177 = scalar_lea.hbm %s1, %s176
        %s178 = scalar_lea.vmem %s63, 6 [#allocation5]
        %s179 = scalar_lea.sflag [#allocation2], 6
        // Predicated region
        $region37: #{tpu_custom_call.1} parent=11 // pred_check
          _
        $region38: #{tpu_custom_call.1} parent=11 // pred_check_branch
          %181 = sbr.rel target = $region40
        $region39: #{tpu_custom_call.1} parent=11 // pred_region
          %182 = sst [smem:[#allocation9]] [#allocation22]
          %183 = sst [smem:[#allocation10]] [#allocation21]
        $region40: #{tpu_custom_call.1} parent=11 // pred_fallthru
          _
        %185 = shalt.err (0)
        %s187 = sshll.u32 %s178, 4
        %s188 = int_to_ptr.vmem [resolvable:$true] %s187
        %190 = dma.hbm_to_vmem [thread:$0]  %s177, 16, %s188, %s179
        %s191 = sadd.s32 %s65, 7
        %s192 = sld [smem:[#allocation4 + %s191]]
        %s193 = sadd.s32 %s67, %s192
        %s194 = smul.addr %s193, 16
        %s195 = scalar_lea.hbm %s1, %s194
        %s196 = scalar_lea.vmem %s63, 7 [#allocation5]
        %s197 = scalar_lea.sflag [#allocation2], 7
        // Predicated region
        $region41: #{tpu_custom_call.1} parent=11 // pred_check
          _
        $region42: #{tpu_custom_call.1} parent=11 // pred_check_branch
          %199 = sbr.rel target = $region44
        $region43: #{tpu_custom_call.1} parent=11 // pred_region
          %200 = sst [smem:[#allocation9]] [#allocation24]
          %201 = sst [smem:[#allocation10]] [#allocation23]
        $region44: #{tpu_custom_call.1} parent=11 // pred_fallthru
          _
        %203 = shalt.err (0)
        %s205 = sshll.u32 %s196, 4
        %s206 = int_to_ptr.vmem [resolvable:$true] %s205
        %208 = dma.hbm_to_vmem [thread:$0]  %s195, 16, %s206, %s197
        %s209 = sld [smem:[#allocation4 + %s65]]
        %211 = dma.done [#allocation2], 16
        %s212 = sld [smem:[#allocation4 + %s83]]
        %214 = dma.done %s89, 16
        %s215 = sld [smem:[#allocation4 + %s101]]
        %217 = dma.done %s107, 16
        %s218 = sld [smem:[#allocation4 + %s119]]
        %220 = dma.done %s125, 16
        %s221 = sld [smem:[#allocation4 + %s137]]
        %223 = dma.done %s143, 16
        %s224 = sld [smem:[#allocation4 + %s155]]
        %226 = dma.done %s161, 16
        %s227 = sld [smem:[#allocation4 + %s173]]
        %229 = dma.done %s179, 16
        %s230 = sld [smem:[#allocation4 + %s191]]
        %232 = dma.done %s197, 16
        %s233 = sand.u32 %s36, 1
        %s234 = scalar_lea.sflag [#allocation6], %s233
        %s235 = sand.u32 %s36, 1
        %s236 = smul.addr %s235, 8
        %s237 = scalar_lea.vmem [#allocation5], %s236
        // Predicated region
        $region45: #{tpu_custom_call.1} parent=11 // pred_check
          %p238 = pneg %p42
        $region46: #{tpu_custom_call.1} parent=11 // pred_check_branch
          %240 = sbr.rel (%p238) target = $region48
        $region47: #{tpu_custom_call.1} parent=11 // pred_region
          %s242 = ssub.s32 128, 128
          %243 = vsyncadd %s234, %s242
          %s244 = sadd.s32 %s22, %s21
          %s245 = smul.addr %s244, 128
          %s246 = scalar_lea.hbm %s2, %s245
          %s248 = sshll.u32 %s237, 4
          %s249 = int_to_ptr.vmem [resolvable:$true] %s248
          %251 = dma.vmem_to_hbm [thread:$0]  %s249, 128, %s246, %s234
        $region48: #{tpu_custom_call.1} parent=11 // pred_fallthru
          _
      $region12: #{tpu_custom_call.1} parent=5 // pred_fallthru
        _
      %p252 = scmp.le.s32.totalorder 1, %s15
      // Predicated region
      $region49: #{tpu_custom_call.1} parent=5 // pred_check
        %p253 = pneg %p252
      $region50: #{tpu_custom_call.1} parent=5 // pred_check_branch
        %255 = sbr.rel (%p253) target = $region52
      $region51: #{tpu_custom_call.1} parent=5 // pred_region
        %s256 = ssub.s32 %s15, 1
        // Predicated region
        $region53: #{tpu_custom_call.1} parent=51 // pred_check
          %p257 = pneg %p48
        $region54: #{tpu_custom_call.1} parent=51 // pred_check_branch
          %259 = sbr.rel (%p257) target = $region56
        $region55: #{tpu_custom_call.1} parent=51 // pred_region
          %s260 = sand.u32 %s39, 1
          %s261 = scalar_lea.sflag [#allocation6], %s260
          %s262 = sand.u32 %s39, 1
          %s263 = smul.addr %s262, 8
          %s264 = scalar_lea.vmem [#allocation5], %s263
          %265 = dma.done %s261, 128
        $region56: #{tpu_custom_call.1} parent=51 // pred_fallthru
          _
      $region52: #{tpu_custom_call.1} parent=5 // pred_fallthru
        _
    $region6: #{tpu_custom_call.1} parent=1 // loop_footer
      %s19 = sadd.s32 1, %s15
    $region7: #{tpu_custom_call.1} parent=1 // loop_footer_branch
      %14 = sbr.rel target = $region3
    $region8: #{tpu_custom_call.1} parent=1 // loop_exit
      _
    %266 = vsyncpa [#allocation6], 1
    %s267 = scalar_lea.sflag [#allocation6], 1
    %268 = vsyncpa %s267, 1
  %269 = vsyncmov [#allocation2]
  %s270 = vpop.sfrf %269
  %p271 = scmp.eq.s32.totalorder %s270, 0
  %p272 = pneg %p271
  %274 = shalt.err (%p272)
  %s275 = scalar_lea.sflag [#allocation2], 1
  %276 = vsyncmov %s275
  %s277 = vpop.sfrf %276
  %p278 = scmp.eq.s32.totalorder %s277, 0
  %p279 = pneg %p278
  %281 = shalt.err (%p279)
  %s282 = scalar_lea.sflag [#allocation2], 2
  %283 = vsyncmov %s282
  %s284 = vpop.sfrf %283
  %p285 = scmp.eq.s32.totalorder %s284, 0
  %p286 = pneg %p285
  %288 = shalt.err (%p286)
  %s289 = scalar_lea.sflag [#allocation2], 3
  %290 = vsyncmov %s289
  %s291 = vpop.sfrf %290
  %p292 = scmp.eq.s32.totalorder %s291, 0
  %p293 = pneg %p292
  %295 = shalt.err (%p293)
  %s296 = scalar_lea.sflag [#allocation2], 4
  %297 = vsyncmov %s296
  %s298 = vpop.sfrf %297
  %p299 = scmp.eq.s32.totalorder %s298, 0
  %p300 = pneg %p299
  %302 = shalt.err (%p300)
  %s303 = scalar_lea.sflag [#allocation2], 5
  %304 = vsyncmov %s303
  %s305 = vpop.sfrf %304
  %p306 = scmp.eq.s32.totalorder %s305, 0
  %p307 = pneg %p306
  %309 = shalt.err (%p307)
  %s310 = scalar_lea.sflag [#allocation2], 6
  %311 = vsyncmov %s310
  %s312 = vpop.sfrf %311
  %p313 = scmp.eq.s32.totalorder %s312, 0
  %p314 = pneg %p313
  %316 = shalt.err (%p314)
  %s317 = scalar_lea.sflag [#allocation2], 7
  %318 = vsyncmov %s317
  %s319 = vpop.sfrf %318
  %p320 = scmp.eq.s32.totalorder %s319, 0
  %p321 = pneg %p320
  %323 = shalt.err (%p321)

</llo_original>
